<compile_context>
chip_gen: v5e
topology: v5e:2x2
jax: 0.10.0
libtpu: 0.0.40
codegen_flags: <defaults>
</compile_context>

<pallas_src>
import functools
import math

import jax
import jax.numpy as jnp
from jax.experimental import pallas as pl
from jax.experimental.pallas import tpu as pltpu


# ----------------------------------------------------------------------------
# Buffer setup — plain JAX glue, mirrors torch __init__ exactly.
# ----------------------------------------------------------------------------
def build_positional_encoding_buffer(d_model: int, max_len: int = 1000) -> jnp.ndarray:
    position = jnp.arange(0, max_len, dtype=jnp.float32)[:, None]            # (max_len, 1)
    div_term = jnp.exp(
        jnp.arange(0, d_model, 2, dtype=jnp.float32) * (-math.log(10000.0) / d_model)
    )
    pe = jnp.zeros((max_len, d_model), dtype=jnp.float32)
    pe = pe.at[:, 0::2].set(jnp.sin(position * div_term))
    pe = pe.at[:, 1::2].set(jnp.cos(position * div_term))
    # unsqueeze(0).transpose(0, 1) -> (max_len, 1, d_model)
    return pe[:, None, :]


# ----------------------------------------------------------------------------
# Kernels
# ----------------------------------------------------------------------------
def _pe_add_kernel_3d(x_ref, pe_ref, o_ref):
    # x: (ts, B, D) in x.dtype; pe: (ts, 1, D) f32.  Broadcast over batch
    # (sublane broadcast, VPU-side), accumulate in f32, cast on store.
    o_ref[...] = (x_ref[...].astype(jnp.float32) + pe_ref[...]).astype(o_ref.dtype)


def _lane_tile(v, reps: int):
    """reps copies of v along the last axis using O(log reps) concats.
    Every piece is itself copies of v, so concatenation order is irrelevant."""
    if reps == 1:
        return v
    out, piece, r = None, v, reps
    while r:
        if r & 1:
            out = piece if out is None else jnp.concatenate([out, piece], axis=-1)
        r >>= 1
        if r:
            piece = jnp.concatenate([piece, piece], axis=-1)
    return out


def _pe_add_kernel_flat(x_ref, pe_ref, o_ref, *, batch):
    # x: (ts, B*D); pe: (ts, D) f32.  Replicate pe across batch along lanes
    # in-register (free — kernel is HBM-bound), accumulate f32, cast on store.
    pe_full = _lane_tile(pe_ref[...], batch)
    o_ref[...] = (x_ref[...].astype(jnp.float32) + pe_full).astype(o_ref.dtype)


# ----------------------------------------------------------------------------
# Sizing helpers
# ----------------------------------------------------------------------------
def _sublane_multiple(dtype) -> int:
    # f32 -> 8, bf16/fp16 -> 16, int8/fp8 -> 32 rows per packed sublane group.
    itemsize = jnp.dtype(dtype).itemsize
    return 8 * max(1, 4 // itemsize)


def _physical_vmem_bytes() -> int:
    try:
        return int(pltpu.get_tpu_info().vmem_capacity_bytes)
    except Exception:
        return 64 << 20          # conservative fallback (v7x per-TC size)


def _choose_seq_tile(S, x_row_bytes, total_row_bytes, sub, ws_budget,
                     target_block_bytes=2 << 20, min_split_bytes=1 << 20):
    """Sequence tile sized by bytes: big enough to amortize the ~0.35 us/step
    pipeline overhead (~2 MiB x blocks), small enough that the double-buffered
    working set fits the per-generation VMEM budget.  Guarantees >= 2 grid steps
    for non-tiny problems so v7x's two TensorCores both participate."""
    def rdown(v):
        return max(sub, (v // sub) * sub)

    cap = rdown(ws_budget // (2 * total_row_bytes)) if ws_budget >= 2 * total_row_bytes * sub else sub
    tgt = rdown(target_block_bytes // max(1, x_row_bytes))
    ts = min(cap, tgt)
    if ts >= S:
        if S >= 2 * sub and S * x_row_bytes >= min_split_bytes:
            ts = ((-(-S // 2)) + sub - 1) // sub * sub     # split into ~2 blocks
        else:
            ts = S                                         # tiny problem: one block
    return min(ts, S)


# ----------------------------------------------------------------------------
# Forward
# ----------------------------------------------------------------------------
def positional_encoding_forward(x: jnp.ndarray, pe: jnp.ndarray, *, row_tile=None) -> jnp.ndarray:
    """x: (S, B, D); pe: (max_len, 1, D) f32.  Returns x + pe[:S], dtype of x.

    NOTE: the pallas_call aliases its output onto x.  To actually reuse x's
    HBM buffer, donate x at the jit boundary, e.g.
    `jax.jit(positional_encoding_forward, donate_argnums=0)`.  Without donation
    XLA inserts a defensive copy (correct, just not free)."""
    S, B, D = x.shape
    itemsize = jnp.dtype(x.dtype).itemsize
    sub = _sublane_multiple(x.dtype)
    pe_seq = pe[:S, 0, :]                                  # (S, D), kept in f32

    dense_3d = (D % 128 == 0) and (B % sub == 0)

    if dense_3d:
        # (B, D) already fills (sublane, lane) vreg tiles densely: tile only the
        # sequence axis; pe broadcast over batch happens inside the kernel, so
        # its HBM traffic stays S*D*4 bytes.
        kernel = _pe_add_kernel_3d
        x_in, pe_in = x, pe_seq[:, None, :]
        total_row_bytes = B * D * (2 * itemsize + 4) + 4 * D   # x + out + f32 temp + pe

        def make_specs(ts):
            return ([pl.BlockSpec((ts, B, D), lambda i: (i, 0, 0)),
                     pl.BlockSpec((ts, 1, D), lambda i: (i, 0, 0))],
                    pl.BlockSpec((ts, B, D), lambda i: (i, 0, 0)),
                    jax.ShapeDtypeStruct((S, B, D), x.dtype))
    else:
        # Awkward (B, D): flatten to a lane-dense (S, B*D) view (fully unmasked
        # stores whenever B*D is a multiple of 128, contiguous HBM DMA always).
        # pe stays (S, D) in HBM; the batch replication is done in-kernel.
        kernel = functools.partial(_pe_add_kernel_flat, batch=B)
        L = B * D
        x_in, pe_in = x.reshape(S, L), pe_seq
        total_row_bytes = L * (2 * itemsize + 8) + 4 * D       # + replicated-pe temp

        def make_specs(ts):
            return ([pl.BlockSpec((ts, L), lambda i: (i, 0)),
                     pl.BlockSpec((ts, D), lambda i: (i, 0))],
                    pl.BlockSpec((ts, L), lambda i: (i, 0)),
                    jax.ShapeDtypeStruct((S, L), x.dtype))

    # --- per-generation VMEM budget & sequence tile -------------------------
    phys = _physical_vmem_bytes()                 # 64 MiB/TC on v7x, 128 MiB on v5e/v6e
    vmem_limit = min(phys // 2, 64 << 20)         # scoped request: 32 MiB v7x, 64 MiB else
    ws_budget = (vmem_limit * 3) // 4             # double-buffered working-set budget
    x_row_bytes = B * D * itemsize

    if row_tile is not None:
        ts = S if row_tile >= S else max(sub, (row_tile // sub) * sub)
    else:
        ts = _choose_seq_tile(S, x_row_bytes, total_row_bytes, sub, ws_budget)

    # Guard (v5e / v7x): very fat rows (huge B*D) — raise the scoped-VMEM request
    # rather than fail to compile.
    if 2 * ts * total_row_bytes + (2 << 20) > vmem_limit:
        vmem_limit = min(2 * ts * total_row_bytes + (8 << 20), phys - (4 << 20))
        # TODO(synk): if even one sublane-group of rows exceeds physical VMEM,
        # add a second (lane) grid axis over D instead of a bigger limit.

    in_specs, out_specs, out_shape = make_specs(ts)
    grid = (pl.cdiv(S, ts),)

    cost = pl.CostEstimate(
        flops=S * B * D,
        transcendentals=0,
        bytes_accessed=2 * S * B * D * itemsize + S * D * 4,
    )

    out = pl.pallas_call(
        kernel,
        out_shape=out_shape,
        grid=grid,
        in_specs=in_specs,
        out_specs=out_specs,
        input_output_aliases={0: 0},              # x is dead after the add (donate at jit)
        cost_estimate=cost,
        compiler_params=pltpu.CompilerParams(
            dimension_semantics=("parallel",),    # independent rows -> v7x megacore shards
            vmem_limit_bytes=int(vmem_limit),
        ),
    )(x_in, pe_in)

    return out.reshape(S, B, D)


# ----------------------------------------------------------------------------
# Demo / correctness check
# ----------------------------------------------------------------------------
if __name__ == "__main__":
    max_len = 1000
    key = jax.random.PRNGKey(0)

    def ref_forward(x, pe):
        s = x.shape[0]
        return (x.astype(jnp.float32) + pe[:s]).astype(x.dtype)

    cases = [
        # flat path: tiny awkward dims (L = 64), single block
        (24, 2, 32, jnp.float32),
        # flat path: lane-dense L = 384, in-kernel batch replication (reps = 4)
        (40, 4, 96, jnp.float32),
        # dense 3-D path: bf16 (f32 accumulate, 16-row sublane alignment)
        (64, 16, 128, jnp.bfloat16),
        # dense 3-D path: f32, large enough for a multi-step pipelined grid
        (512, 8, 128, jnp.float32),
    ]

    for idx, (S, B, D, dt) in enumerate(cases):
        pe = build_positional_encoding_buffer(D, max_len)
        x = jax.random.normal(jax.random.fold_in(key, idx), (S, B, D),
                              dtype=jnp.float32).astype(dt)
        ref = ref_forward(x, pe)                      # computed before the kernel call
        out = jax.block_until_ready(positional_encoding_forward(x, pe))
        assert out.shape == x.shape and out.dtype == x.dtype
        tol = 1e-2 if dt == jnp.bfloat16 else 1e-6
        assert jnp.allclose(out.astype(jnp.float32), ref.astype(jnp.float32),
                            atol=tol, rtol=tol), f"case {idx} mismatch"

    print("KERNEL_OK")
</pallas_src>

<mosaic_0001>
module attributes {stable_mosaic.version = 11 : i64} {
  func.func @_pe_add_kernel_flat(%arg0: i32, %arg1: memref<24x64xf32, #tpu.memory_space<vmem>>, %arg2: memref<24x32xf32, #tpu.memory_space<vmem>>, %arg3: memref<24x64xf32, #tpu.memory_space<vmem>>) attributes {dimension_semantics = [#tpu.dimension_semantics<parallel>], iteration_bounds = array<i64: 1>, scalar_prefetch = 0 : i64, scratch_operands = 0 : i64, tpu.core_type = #tpu.core_type<tc>, window_params = [{transform_indices = @transform_0, window_bounds = array<i64: 24, 64>}, {transform_indices = @transform_1, window_bounds = array<i64: 24, 32>}, {transform_indices = @transform_2, window_bounds = array<i64: 24, 64>}]} {
    %c0 = arith.constant 0 : index
    %c0_0 = arith.constant 0 : index
    %0 = vector.load %arg2[%c0, %c0_0] : memref<24x32xf32, #tpu.memory_space<vmem>>, vector<24x32xf32>
    %1 = tpu.concatenate %0, %0 in 1 : vector<24x32xf32>, vector<24x32xf32> -> vector<24x64xf32>
    %c0_1 = arith.constant 0 : index
    %c0_2 = arith.constant 0 : index
    %2 = vector.load %arg1[%c0_1, %c0_2] : memref<24x64xf32, #tpu.memory_space<vmem>>, vector<24x64xf32>
    %3 = arith.addf %2, %1 : vector<24x64xf32>
    %c0_3 = arith.constant 0 : index
    %c0_4 = arith.constant 0 : index
    %4 = vector.load %arg3[%c0_3, %c0_4] : memref<24x64xf32, #tpu.memory_space<vmem>>, vector<24x64xf32>
    tpu.vector_store %arg3[%c0_3, %c0_4], %3 {strides = array<i32>} : memref<24x64xf32, #tpu.memory_space<vmem>>, vector<24x64xf32>,
    return
  }
  func.func @transform_0(%arg0: i32) -> (i32, i32) {
    %c0_i32 = arith.constant 0 : i32
    %c0_i32_0 = arith.constant 0 : i32
    return %arg0, %c0_i32 : i32, i32
  }
  func.func @transform_1(%arg0: i32) -> (i32, i32) {
    %c0_i32 = arith.constant 0 : i32
    %c0_i32_0 = arith.constant 0 : i32
    return %arg0, %c0_i32 : i32, i32
  }
  func.func @transform_2(%arg0: i32) -> (i32, i32) {
    %c0_i32 = arith.constant 0 : i32
    %c0_i32_0 = arith.constant 0 : i32
    return %arg0, %c0_i32 : i32, i32
  }
}

</mosaic_0001>

<llo_original>
// kernel: tpu_custom_call.1
$region0: #{tpu_custom_call.1}
  #allocation0 [shape = 'u32[]', space=smem, size = 0x4, offset = 0x4, fixed_abs, tag = 'smem constant byte address 0x4 - core index']
  #allocation1 [shape = 'u32[72,128]{1,0:T(1,128)}', space=vmem, size = 0x9000, scoped, tag = 'internal scratch']
  %s0 = inlined_call_operand.hbm [shape: f32[24,64], index: 0, kind: input, shape index: {}, may-alias: {0,2}]
  %s1 = inlined_call_operand.vmem [shape: f32[24,32], index: 1, kind: input, shape index: {}]
  %s2 = inlined_call_operand.hbm [shape: f32[24,64], index: 2, kind: output, shape index: {}, may-alias: {0,2}]
  %s3 = sld [smem:[#allocation0]]
  $region22: #{tpu_custom_call.1} parent=0
    _
  %s5 = ssub.s32 1, %s3
  %s6 = scalar_select 0, %s5, %s3
  $region1: #{tpu_custom_call.1} parent=0
    #allocation2 [shape = 'u8[12288]{0}', space=vmem, size = 0x3000, scoped, tag = 'input window, operand 0, single buffered']
    #allocation3 [shape = 's32[1]{0}', space=sflag, size = 0x4, scoped, tag = 'scoped memory for tpu_custom_call.1']
    #allocation4 [shape = 's32[1]{0}', space=sflag, size = 0x4, scoped, tag = 'scoped memory for tpu_custom_call.1']
    #allocation5 [shape = 'u8[12288]{0}', space=vmem, size = 0x3000, scoped, tag = 'output window, operand 0, single buffered']
    %7 = vsyncpa [#allocation3], 0
    %8 = vsyncpa [#allocation4], 0
    // Predicated region
    $region2: #{tpu_custom_call.1} parent=1 // pred_check
      _
    $region3: #{tpu_custom_call.1} parent=1 // pred_check_branch
      %10 = sbr.rel (0) target = $region5
    $region4: #{tpu_custom_call.1} parent=1 // pred_region
      %12 = vsyncadd [#allocation3], 0
      %s13 = sshll.u32 %s0, 4
      %s14 = int_to_ptr.hbm [resolvable:$true] %s13
      %s15 = sshll.u32 [#allocation2], 4
      %s16 = int_to_ptr.vmem [resolvable:$true] %s15
      %21 = dma.hbm_to_vmem [thread:$0]  %s14, 384, %s16, [#allocation3], 128, 128, 8
    $region5: #{tpu_custom_call.1} parent=1 // pred_fallthru
      _
    // Predicated region
    $region6: #{tpu_custom_call.1} parent=1 // pred_check
      _
    $region7: #{tpu_custom_call.1} parent=1 // pred_check_branch
      %23 = sbr.rel (0) target = $region9
    $region8: #{tpu_custom_call.1} parent=1 // pred_region
      _
    $region9: #{tpu_custom_call.1} parent=1 // pred_fallthru
      _
    // Predicated region
    $region10: #{tpu_custom_call.1} parent=1 // pred_check
      _
    $region11: #{tpu_custom_call.1} parent=1 // pred_check_branch
      %25 = sbr.rel (0) target = $region13
    $region12: #{tpu_custom_call.1} parent=1 // pred_region
      %27 = dma.done [#allocation3], 384
    $region13: #{tpu_custom_call.1} parent=1 // pred_fallthru
      _
    %v28 = vld [vmem:[%s1] sm:$0xff]
    %v29 = vld [vmem:[%s1 + $0x8] sm:$0xff]
    %v30 = vld [vmem:[%s1 + $0x10] sm:$0xff]
    %34 = vrot.lane.b32.xlu0 %v28, 32
    %v35 = vpop.permute.xlu0 %34
    %36 = vrot.lane.b32.xlu0 %v29, 32
    %v37 = vpop.permute.xlu0 %36
    %38 = vrot.lane.b32.xlu0 %v30, 32
    %v39 = vpop.permute.xlu0 %38
    %vm43 = vcmask 261120
    %v44 = vsel %vm43, %v28, %v35
    %v45 = vsel %vm43, %v29, %v37
    %v46 = vsel %vm43, %v30, %v39
    %v47 = vld [vmem:[#allocation2] sm:$0xff]
    %v48 = vld [vmem:[#allocation2 + $0x8] sm:$0xff]
    %v49 = vld [vmem:[#allocation2 + $0x10] sm:$0xff]
    %v50 = vadd.f32 %v47, %v44
    %v51 = vadd.f32 %v48, %v45
    %v52 = vadd.f32 %v49, %v46
    %vm53 = vcmask 523264
    %54 = vst.msk [vmem:[#allocation5] sm:$0xff] %vm53, %v50
    %55 = vst.msk [vmem:[#allocation5 + $0x8] sm:$0xff] %vm53, %v51
    %56 = vst.msk [vmem:[#allocation5 + $0x10] sm:$0xff] %vm53, %v52
    // Predicated region
    $region14: #{tpu_custom_call.1} parent=1 // pred_check
      _
    $region15: #{tpu_custom_call.1} parent=1 // pred_check_branch
      %58 = sbr.rel (0) target = $region17
    $region16: #{tpu_custom_call.1} parent=1 // pred_region
      %60 = vsyncadd [#allocation4], 0
      %s61 = sshll.u32 [#allocation5], 4
      %s62 = int_to_ptr.vmem [resolvable:$true] %s61
      %s63 = sshll.u32 %s2, 4
      %s64 = int_to_ptr.hbm [resolvable:$true] %s63
      %69 = dma.vmem_to_hbm [thread:$0]  %s62, 384, %s64, [#allocation4], 128, 128, 8
    $region17: #{tpu_custom_call.1} parent=1 // pred_fallthru
      _
    // Predicated region
    $region18: #{tpu_custom_call.1} parent=1 // pred_check
      _
    $region19: #{tpu_custom_call.1} parent=1 // pred_check_branch
      %71 = sbr.rel (0) target = $region21
    $region20: #{tpu_custom_call.1} parent=1 // pred_region
      %73 = dma.done [#allocation4], 384
    $region21: #{tpu_custom_call.1} parent=1 // pred_fallthru
      _
    %74 = vsyncpa [#allocation3], 1
    %75 = vsyncpa [#allocation4], 1

</llo_original>
